<compile_context>
chip_gen: v5e
topology: v5e:2x2
jax: 0.10.0
libtpu: 0.0.40
codegen_flags: <defaults>
</compile_context>

<pallas_src>
import functools

import jax
import jax.numpy as jnp
from jax.experimental import pallas as pl
from jax.experimental.pallas import tpu as pltpu

_LANES = 128
_SUBLANES = 8
_MAX_ROWS_PER_BLOCK = 4096  # 4096 * 128 * 4 B = 2 MiB per block (double-buffered ~8 MiB total)


def _make_kernel(task: str, use_bias: bool):
    """Builds the elementwise kernel. Refs are (TB, 128) f32 slabs."""

    def compute(x, bias_scalar):
        x = x.astype(jnp.float32)
        if use_bias:
            x = x + bias_scalar
        if task == "binary":
            # sigmoid = 1 / (1 + exp(-x)); exp + recip run on the EUP slot.
            x = 1.0 / (1.0 + jnp.exp(-x))
        return x

    if use_bias:

        def kernel(bias_ref, x_ref, o_ref):
            # bias_ref: SMEM (1,) f32 ; x_ref/o_ref: VMEM (TB, 128)
            o_ref[...] = compute(x_ref[...], bias_ref[0]).astype(o_ref.dtype)

    else:

        def kernel(x_ref, o_ref):
            o_ref[...] = compute(x_ref[...], None).astype(o_ref.dtype)

    return kernel


@functools.partial(jax.jit, static_argnames=("task", "use_bias"))
def prediction_layer(x, bias=None, *, task="binary", use_bias=True):
    """Pallas equivalent of PredictionLayer(task, use_bias).forward(X).

    x    : any-shape float array (typically (batch, 1) logits)
    bias : (1,) float parameter (only used when use_bias=True)
    returns an array with the same shape/dtype as x.
    """
    if task not in ("binary", "multiclass", "regression"):
        raise ValueError("task must be binary,multiclass or regression")

    orig_shape = x.shape
    orig_dtype = x.dtype
    n = x.size

    # ---- layout plumbing: present a lane/sublane-dense (R, 128) slab --------
    chunk = _LANES * _SUBLANES  # 1024 elems = one f32 vreg
    n_pad = ((n + chunk - 1) // chunk) * chunk
    xf = x.reshape(-1)
    if n_pad != n:
        xf = jnp.pad(xf, (0, n_pad - n))
    rows = n_pad // _LANES                      # multiple of 8 by construction
    x2 = xf.reshape(rows, _LANES)

    tb = rows if rows <= _MAX_ROWS_PER_BLOCK else _MAX_ROWS_PER_BLOCK  # multiple of 8
    grid = (pl.cdiv(rows, tb),)

    kernel = _make_kernel(task, use_bias)

    in_specs = []
    args = []
    if use_bias:
        bias32 = jnp.asarray(bias, jnp.float32).reshape(1)
        in_specs.append(
            pl.BlockSpec((1,), lambda i: (0,), memory_space=pltpu.SMEM)
        )
        args.append(bias32)
    in_specs.append(pl.BlockSpec((tb, _LANES), lambda i: (i, 0)))
    args.append(x2)

    out2 = pl.pallas_call(
        kernel,
        out_shape=jax.ShapeDtypeStruct((rows, _LANES), orig_dtype),
        grid=grid,
        in_specs=in_specs,
        out_specs=pl.BlockSpec((tb, _LANES), lambda i: (i, 0)),
        compiler_params=pltpu.CompilerParams(
            dimension_semantics=("parallel",),
        ),
    )(*args)

    return out2.reshape(-1)[:n].reshape(orig_shape)


def _reference(x, bias, task, use_bias):
    """Plain-JAX reference mirroring the PyTorch forward."""
    out = x
    if use_bias:
        out = out + bias
    if task == "binary":
        out = jax.nn.sigmoid(out)
    return out


if __name__ == "__main__":
    key = jax.random.PRNGKey(0)
    k1, k2, k3, kb = jax.random.split(key, 4)

    # (batch, 1) binary logits with bias
    x_bin = jax.random.normal(k1, (8, 1), dtype=jnp.float32)
    # (batch, n_classes) multiclass logits with bias
    x_mc = jax.random.normal(k2, (4, 10), dtype=jnp.float32)
    # (batch, 1) regression output, no bias
    x_reg = jax.random.normal(k3, (8, 1), dtype=jnp.float32)
    bias = jax.random.normal(kb, (1,), dtype=jnp.float32) * 0.1

    cases = [
        (x_bin, bias, "binary", True),
        (x_mc, bias, "multiclass", True),
        (x_reg, None, "regression", False),
        (x_bin, None, "binary", False),
    ]

    for xv, bv, task, use_bias in cases:
        out = prediction_layer(xv, bv, task=task, use_bias=use_bias)
        out = jax.block_until_ready(out)
        ref = _reference(xv, bv if use_bias else None, task, use_bias)
        assert out.shape == xv.shape, (task, use_bias, out.shape)
        assert jnp.allclose(out, ref, atol=1e-6, rtol=1e-6), (task, use_bias)

    print("KERNEL_OK")
</pallas_src>

<mosaic_0001>
module attributes {stable_mosaic.version = 11 : i64} {
  func.func @kernel(%arg0: i32, %arg1: memref<1xf32, #tpu.memory_space<smem>>, %arg2: memref<8x128xf32, #tpu.memory_space<vmem>>, %arg3: memref<8x128xf32, #tpu.memory_space<vmem>>) attributes {dimension_semantics = [#tpu.dimension_semantics<parallel>], iteration_bounds = array<i64: 1>, scalar_prefetch = 0 : i64, scratch_operands = 0 : i64, tpu.core_type = #tpu.core_type<tc>, window_params = [{transform_indices = @transform_0, window_bounds = array<i64: 1>}, {transform_indices = @transform_1, window_bounds = array<i64: 8, 128>}, {transform_indices = @transform_2, window_bounds = array<i64: 8, 128>}]} {
    %c0 = arith.constant 0 : index
    %c0_0 = arith.constant 0 : index
    %0 = vector.load %arg2[%c0, %c0_0] : memref<8x128xf32, #tpu.memory_space<vmem>>, vector<8x128xf32>
    %c0_1 = arith.constant 0 : index
    %1 = memref.load %arg1[%c0_1] : memref<1xf32, #tpu.memory_space<smem>>
    %2 = vector.broadcast %1 : f32 to vector<8x128xf32>
    %3 = arith.addf %0, %2 : vector<8x128xf32>
    %cst = arith.constant 0.000000e+00 : f32
    %4 = vector.broadcast %cst : f32 to vector<8x128xf32>
    %5 = arith.subf %4, %3 : vector<8x128xf32>
    %6 = math.exp %5 : vector<8x128xf32>
    %cst_2 = arith.constant 1.000000e+00 : f32
    %7 = vector.broadcast %cst_2 : f32 to vector<8x128xf32>
    %8 = arith.addf %7, %6 : vector<8x128xf32>
    %cst_3 = arith.constant 1.000000e+00 : f32
    %9 = vector.broadcast %cst_3 : f32 to vector<8x128xf32>
    %10 = arith.divf %9, %8 : vector<8x128xf32>
    %c0_4 = arith.constant 0 : index
    %c0_5 = arith.constant 0 : index
    %11 = vector.load %arg3[%c0_4, %c0_5] : memref<8x128xf32, #tpu.memory_space<vmem>>, vector<8x128xf32>
    tpu.vector_store %arg3[%c0_4, %c0_5], %10 {strides = array<i32>} : memref<8x128xf32, #tpu.memory_space<vmem>>, vector<8x128xf32>,
    return
  }
  func.func @transform_0(%arg0: i32) -> i32 {
    %c0_i32 = arith.constant 0 : i32
    %c0_i32_0 = arith.constant 0 : i32
    return %c0_i32 : i32
  }
  func.func @transform_1(%arg0: i32) -> (i32, i32) {
    %c0_i32 = arith.constant 0 : i32
    %c0_i32_0 = arith.constant 0 : i32
    return %arg0, %c0_i32 : i32, i32
  }
  func.func @transform_2(%arg0: i32) -> (i32, i32) {
    %c0_i32 = arith.constant 0 : i32
    %c0_i32_0 = arith.constant 0 : i32
    return %arg0, %c0_i32 : i32, i32
  }
}

</mosaic_0001>

<llo_original>
// kernel: prediction_layer.1
$region0: #{prediction_layer.1}
  #allocation0 [shape = 'u32[]', space=smem, size = 0x4, offset = 0x4, fixed_abs, tag = 'smem constant byte address 0x4 - core index']
  #allocation1 [shape = 'u32[72,128]{1,0:T(1,128)}', space=vmem, size = 0x9000, scoped, tag = 'internal scratch']
  #allocation2 [shape = 'f32[1]{0:T(128)S(6)}', space=smem, size = 0x200, scoped, tag = 'scoped memory for prediction_layer.1']
  %s0 = inlined_call_operand.<no memory space> [shape: f32[1], index: 0, kind: input, shape index: {}]
  %s1 = inlined_call_operand.vmem [shape: f32[8,128], index: 1, kind: input, shape index: {}]
  %s2 = inlined_call_operand.vmem [shape: f32[8,128], index: 2, kind: output, shape index: {}]
  %s3 = sld [smem:[#allocation0]]
  $region18: #{prediction_layer.1} parent=0
    _
  %s5 = ssub.s32 1, %s3
  %s6 = scalar_select 0, %s5, %s3
  %7 = sst [smem:[#allocation2]] %s0
  // Predicated region
  $region2: #{prediction_layer.1} parent=0 // pred_check
    _
  $region3: #{prediction_layer.1} parent=0 // pred_check_branch
    %9 = sbr.rel (0) target = $region5
  $region4: #{prediction_layer.1} parent=0 // pred_region
    _
  $region5: #{prediction_layer.1} parent=0 // pred_fallthru
    _
  // Predicated region
  $region6: #{prediction_layer.1} parent=0 // pred_check
    _
  $region7: #{prediction_layer.1} parent=0 // pred_check_branch
    %11 = sbr.rel (0) target = $region9
  $region8: #{prediction_layer.1} parent=0 // pred_region
    _
  $region9: #{prediction_layer.1} parent=0 // pred_fallthru
    _
  %v12 = vld [vmem:[%s1] sm:$0xff]
  %s13 = sld [smem:[#allocation2]]
  %v14 = vstv %s13
  %v15 = vadd.f32 %v12, %v14
  %v16 = vsub.f32 0.0, %v15
  %v17 = vmul.f32 %v16, 1.442695
  %v18 = vpow.pop %v17
  %v19 = vadd.f32 %v18, 1.0
  %v20 = vrcp.pop %v19
  %v21 = vmul.f32 %v19, %v20
  %v22 = vsub.f32 1.0, %v21
  %v23 = vmul.f32 %v20, %v22
  %v24 = vadd.f32 %v20, %v23
  %vm25 = vweird.f32 %v19
  %vm26 = vweird.f32 %v20
  %vm27 = vmor %vm25, %vm26
  %v28 = vsel %vm27, %v20, %v24
  %v29 = vand.u32 2147483647, %v19
  %vm30 = vcmp.eq.f32.partialorder %v29, 8.507059e+37
  %v31 = vand.u32 %v19, 2147483648
  %v32 = vor.u32 1.1754944e-38, %v31
  %v33 = vsel %vm30, %v32, %v28
  %v34 = vmul.f32 1.0, %v33
  %35 = vst [vmem:[%s2] sm:$0xff] %v34
  // Predicated region
  $region10: #{prediction_layer.1} parent=0 // pred_check
    _
  $region11: #{prediction_layer.1} parent=0 // pred_check_branch
    %37 = sbr.rel (0) target = $region13
  $region12: #{prediction_layer.1} parent=0 // pred_region
    _
  $region13: #{prediction_layer.1} parent=0 // pred_fallthru
    _
  // Predicated region
  $region14: #{prediction_layer.1} parent=0 // pred_check
    _
  $region15: #{prediction_layer.1} parent=0 // pred_check_branch
    %39 = sbr.rel (0) target = $region17
  $region16: #{prediction_layer.1} parent=0 // pred_region
    _
  $region17: #{prediction_layer.1} parent=0 // pred_fallthru
    _

</llo_original>
